<compile_context>
chip_gen: v6e
topology: v6e:2x2x1
jax: 0.10.0
libtpu: 0.0.40
codegen_flags: <defaults>
</compile_context>

<pallas_src>
import jax
import jax.numpy as jnp
from jax.experimental import pallas as pl
from jax.experimental.pallas import tpu as pltpu

HIDDEN = 100       # logical hidden width of the module
HIDDEN_PAD = 128   # padded to a full 128-lane tile


def _rep_kernel(x_ref, w1_ref, b1_ref, w2_ref, b2_ref, w3_ref, b3_ref, o_ref):
    # Shapes (H = HIDDEN_PAD, TM = batch tile, batch on the lane axis):
    #   x_ref  : [2, TM]            o_ref  : [2, TM]
    #   w1_ref : [H, 2]   b1_ref : [H, 1]
    #   w2_ref : [H, H]   b2_ref : [H, 1]   (w2 may be bf16)
    #   w3_ref : [2, H]   b3_ref : [2, 1]
    x = x_ref[...]
    w1 = w1_ref[...]

    # Layer 1: K=2 contraction on the VPU (two broadcast FMAs) — skip the MXU entirely.
    z1 = w1[:, 0:1] * x[0:1, :] + w1[:, 1:2] * x[1:2, :] + b1_ref[...]
    h1 = jnp.tanh(z1)                                                  # [H, TM] f32

    # Layer 2: dominant [H,H] @ [H,TM] matmul on the MXU.
    # Operands in w2's dtype (bf16 on v6e/v7x), f32 accumulation; bias/tanh in f32.
    z2 = jnp.dot(w2_ref[...], h1.astype(w2_ref.dtype),
                 preferred_element_type=jnp.float32) + b2_ref[...]
    h2 = jnp.tanh(z2)                                                  # [H, TM] f32

    # Layer 3: [2,H] @ [H,TM] -> [2,TM] (tiny; keep f32).
    z3 = jnp.dot(w3_ref[...], h2, preferred_element_type=jnp.float32) + b3_ref[...]
    o_ref[...] = jnp.tanh(z3).astype(o_ref.dtype)


def _prep_weights(params, use_bf16):
    """Zero-pad hidden dim to 128 and lay weights out in PyTorch [out, in] order."""
    H = HIDDEN_PAD
    f32 = jnp.float32
    w1 = jnp.zeros((H, 2), f32).at[:HIDDEN, :].set(params["w1"].astype(f32))
    b1 = jnp.zeros((H, 1), f32).at[:HIDDEN, 0].set(params["b1"].astype(f32))
    w2 = jnp.zeros((H, H), f32).at[:HIDDEN, :HIDDEN].set(params["w2"].astype(f32))
    b2 = jnp.zeros((H, 1), f32).at[:HIDDEN, 0].set(params["b2"].astype(f32))
    w3 = jnp.zeros((2, H), f32).at[:, :HIDDEN].set(params["w3"].astype(f32))
    b3 = params["b3"].astype(f32).reshape(2, 1)
    if use_bf16:
        w2 = w2.astype(jnp.bfloat16)   # MXU operand only; elementwise math stays f32
    return w1, b1, w2, b2, w3, b3


def rep_forward(x, params, *, tm=2048, use_bf16=True):
    """Forward pass of `rep`.

    x      : [N, 2] float32
    params : PyTorch-layout weights: w1 [100,2], b1 [100], w2 [100,100], b2 [100],
             w3 [2,100], b3 [2].
    returns: [N, 2] float32
    """
    n = x.shape[0]
    w1, b1, w2, b2, w3, b3 = _prep_weights(params, use_bf16)

    # Batch tiling: TM a multiple of 128 (lane-dense, unmasked loads/stores);
    # pad N up to a multiple of TM so no ragged tail block exists.
    tm = max(128, (tm // 128) * 128)
    n_pad = max(tm, ((n + tm - 1) // tm) * tm)
    n_blocks = n_pad // tm

    # Put the batch dimension on the 128-lane axis: [2, N_pad].
    xt = jnp.zeros((2, n_pad), jnp.float32).at[:, :n].set(x.astype(jnp.float32).T)

    def resident(arr):   # full-array block, same tile for every grid step -> stays in VMEM
        return pl.BlockSpec(arr.shape, lambda i: (0, 0))

    flops = 2 * n_pad * (2 * HIDDEN_PAD + HIDDEN_PAD * HIDDEN_PAD + HIDDEN_PAD * 2)
    transcendentals = n_pad * (2 * HIDDEN_PAD + 2)
    weight_bytes = sum(int(a.size * a.dtype.itemsize) for a in (w1, b1, w2, b2, w3, b3))
    bytes_accessed = 2 * (2 * n_pad * 4) + weight_bytes   # x in + out + resident weights

    out_t = pl.pallas_call(
        _rep_kernel,
        out_shape=jax.ShapeDtypeStruct((2, n_pad), jnp.float32),
        grid=(n_blocks,),
        in_specs=[
            pl.BlockSpec((2, tm), lambda i: (0, i)),   # x tile, pipelined over batch
            resident(w1), resident(b1),
            resident(w2), resident(b2),
            resident(w3), resident(b3),
        ],
        out_specs=pl.BlockSpec((2, tm), lambda i: (0, i)),
        compiler_params=pltpu.CompilerParams(
            dimension_semantics=("parallel",),          # megacore-shardable on v7x
            vmem_limit_bytes=32 * 1024 * 1024,          # fits v7x 64 MiB physical VMEM
        ),
        cost_estimate=pl.CostEstimate(
            flops=flops, transcendentals=transcendentals, bytes_accessed=bytes_accessed),
    )(xt, w1, b1, w2, b2, w3, b3)

    return out_t[:, :n].T


def init_params(key, scale=0.1):
    """Deterministic init; weights kept in PyTorch [out, in] layout."""
    k1, k2, k3, k4, k5, k6 = jax.random.split(key, 6)
    return {
        "w1": scale * jax.random.normal(k1, (100, 2), dtype=jnp.float32),
        "b1": scale * jax.random.normal(k2, (100,), dtype=jnp.float32),
        "w2": scale * jax.random.normal(k3, (100, 100), dtype=jnp.float32),
        "b2": scale * jax.random.normal(k4, (100,), dtype=jnp.float32),
        "w3": scale * jax.random.normal(k5, (2, 100), dtype=jnp.float32),
        "b3": scale * jax.random.normal(k6, (2,), dtype=jnp.float32),
    }


def rep_reference(x, params):
    """Pure-JAX f32 reference (PyTorch Linear semantics: x @ W.T + b)."""
    h = jnp.tanh(x @ params["w1"].T + params["b1"])
    h = jnp.tanh(h @ params["w2"].T + params["b2"])
    h = jnp.tanh(h @ params["w3"].T + params["b3"])
    return h


if __name__ == "__main__":
    key = jax.random.PRNGKey(0)
    kx, kp = jax.random.split(key)
    params = init_params(kp)

    # Small single-tile batch, and a ragged multi-tile batch (exercises grid + padding).
    for batch, tm in ((8, 128), (300, 128)):
        x = jax.random.normal(jax.random.fold_in(kx, batch), (batch, 2), dtype=jnp.float32)
        out = rep_forward(x, params, tm=tm)
        jax.block_until_ready(out)
        ref = rep_reference(x, params)
        assert out.shape == (batch, 2)
        max_err = float(jnp.max(jnp.abs(out - ref)))
        # bf16 only on the layer-2 MXU operands (f32 accumulate) -> small error.
        assert jnp.allclose(out, ref, atol=2e-2, rtol=2e-2), f"mismatch, max err {max_err}"

    print("KERNEL_OK")
</pallas_src>

<mosaic_0001>
module attributes {stable_mosaic.version = 11 : i64} {
  func.func @_rep_kernel(%arg0: i32, %arg1: memref<2x128xf32, #tpu.memory_space<vmem>>, %arg2: memref<128x2xf32, #tpu.memory_space<vmem>>, %arg3: memref<128x1xf32, #tpu.memory_space<vmem>>, %arg4: memref<128x128xbf16, #tpu.memory_space<vmem>>, %arg5: memref<128x1xf32, #tpu.memory_space<vmem>>, %arg6: memref<2x128xf32, #tpu.memory_space<vmem>>, %arg7: memref<2x1xf32, #tpu.memory_space<vmem>>, %arg8: memref<2x128xf32, #tpu.memory_space<vmem>>) attributes {dimension_semantics = [#tpu.dimension_semantics<parallel>], iteration_bounds = array<i64: 1>, scalar_prefetch = 0 : i64, scratch_operands = 0 : i64, tpu.core_type = #tpu.core_type<tc>, window_params = [{transform_indices = @transform_0, window_bounds = array<i64: 2, 128>}, {pipeline_mode = #tpu.pipeline_mode<synchronous>, transform_indices = @transform_1, window_bounds = array<i64: 128, 2>}, {pipeline_mode = #tpu.pipeline_mode<synchronous>, transform_indices = @transform_2, window_bounds = array<i64: 128, 1>}, {pipeline_mode = #tpu.pipeline_mode<synchronous>, transform_indices = @transform_3, window_bounds = array<i64: 128, 128>}, {pipeline_mode = #tpu.pipeline_mode<synchronous>, transform_indices = @transform_4, window_bounds = array<i64: 128, 1>}, {pipeline_mode = #tpu.pipeline_mode<synchronous>, transform_indices = @transform_5, window_bounds = array<i64: 2, 128>}, {pipeline_mode = #tpu.pipeline_mode<synchronous>, transform_indices = @transform_6, window_bounds = array<i64: 2, 1>}, {transform_indices = @transform_7, window_bounds = array<i64: 2, 128>}]} {
    %c0 = arith.constant 0 : index
    %c0_0 = arith.constant 0 : index
    %0 = vector.load %arg1[%c0, %c0_0] : memref<2x128xf32, #tpu.memory_space<vmem>>, vector<2x128xf32>
    %c0_1 = arith.constant 0 : index
    %c0_2 = arith.constant 0 : index
    %1 = vector.load %arg2[%c0_1, %c0_2] : memref<128x2xf32, #tpu.memory_space<vmem>>, vector<128x2xf32>
    %2 = vector.extract_strided_slice %1 {offsets = [0, 0], sizes = [128, 1], strides = [1, 1]} : vector<128x2xf32> to vector<128x1xf32>
    %3 = vector.extract_strided_slice %0 {offsets = [0, 0], sizes = [1, 128], strides = [1, 1]} : vector<2x128xf32> to vector<1x128xf32>
    %4 = vector.broadcast %2 : vector<128x1xf32> to vector<128x128xf32>
    %5 = vector.broadcast %3 : vector<1x128xf32> to vector<128x128xf32>
    %6 = arith.mulf %4, %5 : vector<128x128xf32>
    %7 = vector.extract_strided_slice %1 {offsets = [0, 1], sizes = [128, 1], strides = [1, 1]} : vector<128x2xf32> to vector<128x1xf32>
    %8 = vector.extract_strided_slice %0 {offsets = [1, 0], sizes = [1, 128], strides = [1, 1]} : vector<2x128xf32> to vector<1x128xf32>
    %9 = vector.broadcast %7 : vector<128x1xf32> to vector<128x128xf32>
    %10 = vector.broadcast %8 : vector<1x128xf32> to vector<128x128xf32>
    %11 = arith.mulf %9, %10 : vector<128x128xf32>
    %12 = arith.addf %6, %11 : vector<128x128xf32>
    %c0_3 = arith.constant 0 : index
    %c0_4 = arith.constant 0 : index
    %13 = vector.load %arg3[%c0_3, %c0_4] : memref<128x1xf32, #tpu.memory_space<vmem>>, vector<128x1xf32>
    %14 = vector.broadcast %13 : vector<128x1xf32> to vector<128x128xf32>
    %15 = arith.addf %12, %14 : vector<128x128xf32>
    %16 = math.tanh %15 : vector<128x128xf32>
    %c0_5 = arith.constant 0 : index
    %c0_6 = arith.constant 0 : index
    %17 = vector.load %arg4[%c0_5, %c0_6] : memref<128x128xbf16, #tpu.memory_space<vmem>>, vector<128x128xbf16>
    %18 = arith.truncf %16 : vector<128x128xf32> to vector<128x128xbf16>
    %cst = arith.constant dense<0.000000e+00> : vector<128x128xf32>
    %19 = tpu.matmul %17, %18, %cst {dimension_numbers = #tpu.dot_dimension_numbers<[1], [0], [0], [1], [0, 0, 1, 1], [], []>} : vector<128x128xbf16>, vector<128x128xbf16>, vector<128x128xf32> -> vector<128x128xf32>
    %c0_7 = arith.constant 0 : index
    %c0_8 = arith.constant 0 : index
    %20 = vector.load %arg5[%c0_7, %c0_8] : memref<128x1xf32, #tpu.memory_space<vmem>>, vector<128x1xf32>
    %21 = vector.broadcast %20 : vector<128x1xf32> to vector<128x128xf32>
    %22 = arith.addf %19, %21 : vector<128x128xf32>
    %23 = math.tanh %22 : vector<128x128xf32>
    %c0_9 = arith.constant 0 : index
    %c0_10 = arith.constant 0 : index
    %24 = vector.load %arg6[%c0_9, %c0_10] : memref<2x128xf32, #tpu.memory_space<vmem>>, vector<2x128xf32>
    %cst_11 = arith.constant dense<0.000000e+00> : vector<2x128xf32>
    %25 = tpu.matmul %24, %23, %cst_11 {dimension_numbers = #tpu.dot_dimension_numbers<[1], [0], [0], [1], [0, 0, 1, 1], [], []>} : vector<2x128xf32>, vector<128x128xf32>, vector<2x128xf32> -> vector<2x128xf32>
    %c0_12 = arith.constant 0 : index
    %c0_13 = arith.constant 0 : index
    %26 = vector.load %arg7[%c0_12, %c0_13] : memref<2x1xf32, #tpu.memory_space<vmem>>, vector<2x1xf32>
    %27 = vector.broadcast %26 : vector<2x1xf32> to vector<2x128xf32>
    %28 = arith.addf %25, %27 : vector<2x128xf32>
    %29 = math.tanh %28 : vector<2x128xf32>
    %c0_14 = arith.constant 0 : index
    %c0_15 = arith.constant 0 : index
    %30 = vector.load %arg8[%c0_14, %c0_15] : memref<2x128xf32, #tpu.memory_space<vmem>>, vector<2x128xf32>
    tpu.vector_store %arg8[%c0_14, %c0_15], %29 {strides = array<i32>} : memref<2x128xf32, #tpu.memory_space<vmem>>, vector<2x128xf32>,
    return
  }
  func.func @transform_0(%arg0: i32) -> (i32, i32) {
    %c0_i32 = arith.constant 0 : i32
    %c0_i32_0 = arith.constant 0 : i32
    return %c0_i32, %arg0 : i32, i32
  }
  func.func @transform_1(%arg0: i32) -> (i32, i32) {
    %c0_i32 = arith.constant 0 : i32
    %c0_i32_0 = arith.constant 0 : i32
    %c0_i32_1 = arith.constant 0 : i32
    return %c0_i32, %c0_i32_0 : i32, i32
  }
  func.func @transform_2(%arg0: i32) -> (i32, i32) {
    %c0_i32 = arith.constant 0 : i32
    %c0_i32_0 = arith.constant 0 : i32
    %c0_i32_1 = arith.constant 0 : i32
    return %c0_i32, %c0_i32_0 : i32, i32
  }
  func.func @transform_3(%arg0: i32) -> (i32, i32) {
    %c0_i32 = arith.constant 0 : i32
    %c0_i32_0 = arith.constant 0 : i32
    %c0_i32_1 = arith.constant 0 : i32
    return %c0_i32, %c0_i32_0 : i32, i32
  }
  func.func @transform_4(%arg0: i32) -> (i32, i32) {
    %c0_i32 = arith.constant 0 : i32
    %c0_i32_0 = arith.constant 0 : i32
    %c0_i32_1 = arith.constant 0 : i32
    return %c0_i32, %c0_i32_0 : i32, i32
  }
  func.func @transform_5(%arg0: i32) -> (i32, i32) {
    %c0_i32 = arith.constant 0 : i32
    %c0_i32_0 = arith.constant 0 : i32
    %c0_i32_1 = arith.constant 0 : i32
    return %c0_i32, %c0_i32_0 : i32, i32
  }
  func.func @transform_6(%arg0: i32) -> (i32, i32) {
    %c0_i32 = arith.constant 0 : i32
    %c0_i32_0 = arith.constant 0 : i32
    %c0_i32_1 = arith.constant 0 : i32
    return %c0_i32, %c0_i32_0 : i32, i32
  }
  func.func @transform_7(%arg0: i32) -> (i32, i32) {
    %c0_i32 = arith.constant 0 : i32
    %c0_i32_0 = arith.constant 0 : i32
    return %c0_i32, %arg0 : i32, i32
  }
}

</mosaic_0001>

<llo_original>
// kernel: tpu_custom_call.1
$region0: #{tpu_custom_call.1}
  #allocation0 [shape = 'u32[]', space=smem, size = 0x4, offset = 0x4, fixed_abs, tag = 'smem constant byte address 0x4 - core index']
  #allocation1 [shape = 'u32[144,128]{1,0:T(1,128)}', space=vmem, size = 0x12000, scoped, tag = 'internal scratch']
  %s0 = inlined_call_operand.vmem [shape: f32[2,128], index: 0, kind: input, shape index: {}]
  %s1 = inlined_call_operand.vmem [shape: f32[128,2], index: 1, kind: input, shape index: {}]
  %s2 = inlined_call_operand.vmem [shape: f32[128,1], index: 2, kind: input, shape index: {}]
  %s3 = inlined_call_operand.vmem [shape: bf16[128,128], index: 3, kind: input, shape index: {}]
  %s4 = inlined_call_operand.vmem [shape: f32[128,1], index: 4, kind: input, shape index: {}]
  %s5 = inlined_call_operand.vmem [shape: f32[2,128], index: 5, kind: input, shape index: {}]
  %s6 = inlined_call_operand.vmem [shape: f32[2,1], index: 6, kind: input, shape index: {}]
  %s7 = inlined_call_operand.hbm [shape: f32[2,128], index: 7, kind: output, shape index: {}]
  %s8 = sld [smem:[#allocation0]]
  $region38: #{tpu_custom_call.1} parent=0
    _
  %s10 = ssub.s32 1, %s8
  %s11 = scalar_select 0, %s10, %s8
  $region1: #{tpu_custom_call.1} parent=0
    #allocation2 [shape = 'u8[1024]{0}', space=vmem, size = 0x400, scoped, tag = 'output window, operand 0, single buffered']
    #allocation3 [shape = 's32[1]{0}', space=sflag, size = 0x4, scoped, tag = 'scoped memory for tpu_custom_call.1']
    %12 = vsyncpa [#allocation3], 0
    // Predicated region
    $region2: #{tpu_custom_call.1} parent=1 // pred_check
      _
    $region3: #{tpu_custom_call.1} parent=1 // pred_check_branch
      %14 = sbr.rel (0) target = $region5
    $region4: #{tpu_custom_call.1} parent=1 // pred_region
      _
    $region5: #{tpu_custom_call.1} parent=1 // pred_fallthru
      _
    // Predicated region
    $region6: #{tpu_custom_call.1} parent=1 // pred_check
      _
    $region7: #{tpu_custom_call.1} parent=1 // pred_check_branch
      %16 = sbr.rel (0) target = $region9
    $region8: #{tpu_custom_call.1} parent=1 // pred_region
      _
    $region9: #{tpu_custom_call.1} parent=1 // pred_fallthru
      _
    // Predicated region
    $region10: #{tpu_custom_call.1} parent=1 // pred_check
      _
    $region11: #{tpu_custom_call.1} parent=1 // pred_check_branch
      %18 = sbr.rel (0) target = $region13
    $region12: #{tpu_custom_call.1} parent=1 // pred_region
      _
    $region13: #{tpu_custom_call.1} parent=1 // pred_fallthru
      _
    // Predicated region
    $region14: #{tpu_custom_call.1} parent=1 // pred_check
      _
    $region15: #{tpu_custom_call.1} parent=1 // pred_check_branch
      %20 = sbr.rel (0) target = $region17
    $region16: #{tpu_custom_call.1} parent=1 // pred_region
      _
    $region17: #{tpu_custom_call.1} parent=1 // pred_fallthru
      _
    // Predicated region
    $region18: #{tpu_custom_call.1} parent=1 // pred_check
      _
    $region19: #{tpu_custom_call.1} parent=1 // pred_check_branch
      %22 = sbr.rel (0) target = $region21
    $region20: #{tpu_custom_call.1} parent=1 // pred_region
      _
    $region21: #{tpu_custom_call.1} parent=1 // pred_fallthru
      _
    // Predicated region
    $region22: #{tpu_custom_call.1} parent=1 // pred_check
      _
    $region23: #{tpu_custom_call.1} parent=1 // pred_check_branch
      %24 = sbr.rel (0) target = $region25
    $region24: #{tpu_custom_call.1} parent=1 // pred_region
      _
    $region25: #{tpu_custom_call.1} parent=1 // pred_fallthru
      _
    // Predicated region
    $region26: #{tpu_custom_call.1} parent=1 // pred_check
      _
    $region27: #{tpu_custom_call.1} parent=1 // pred_check_branch
      %26 = sbr.rel (0) target = $region29
    $region28: #{tpu_custom_call.1} parent=1 // pred_region
      _
    $region29: #{tpu_custom_call.1} parent=1 // pred_fallthru
      _
    %v28 = vld [vmem:[%s0] sm:$0x3]
    %v29 = vld [vmem:[%s1] sm:$0xff]
    %v30 = vld [vmem:[%s1 + $0x8] sm:$0xff]
    %v31 = vld [vmem:[%s1 + $0x10] sm:$0xff]
    %v32 = vld [vmem:[%s1 + $0x18] sm:$0xff]
    %v33 = vld [vmem:[%s1 + $0x20] sm:$0xff]
    %v34 = vld [vmem:[%s1 + $0x28] sm:$0xff]
    %v35 = vld [vmem:[%s1 + $0x30] sm:$0xff]
    %v36 = vld [vmem:[%s1 + $0x38] sm:$0xff]
    %v37 = vld [vmem:[%s1 + $0x40] sm:$0xff]
    %v38 = vld [vmem:[%s1 + $0x48] sm:$0xff]
    %v39 = vld [vmem:[%s1 + $0x50] sm:$0xff]
    %v40 = vld [vmem:[%s1 + $0x58] sm:$0xff]
    %v41 = vld [vmem:[%s1 + $0x60] sm:$0xff]
    %v42 = vld [vmem:[%s1 + $0x68] sm:$0xff]
    %v43 = vld [vmem:[%s1 + $0x70] sm:$0xff]
    %v44 = vld [vmem:[%s1 + $0x78] sm:$0xff]
    %46 = vset.pattern.permute.xlu0 0
    %47 = vperm.xlu0 %46, %v29
    %v48 = vpop.permute.xlu0 %47
    %51 = vset.pattern.permute.xlu0 0
    %52 = vperm.xlu0 %51, %v30
    %v53 = vpop.permute.xlu0 %52
    %56 = vset.pattern.permute.xlu0 0
    %57 = vperm.xlu0 %56, %v31
    %v58 = vpop.permute.xlu0 %57
    %61 = vset.pattern.permute.xlu0 0
    %62 = vperm.xlu0 %61, %v32
    %v63 = vpop.permute.xlu0 %62
    %66 = vset.pattern.permute.xlu0 0
    %67 = vperm.xlu0 %66, %v33
    %v68 = vpop.permute.xlu0 %67
    %71 = vset.pattern.permute.xlu0 0
    %72 = vperm.xlu0 %71, %v34
    %v73 = vpop.permute.xlu0 %72
    %76 = vset.pattern.permute.xlu0 0
    %77 = vperm.xlu0 %76, %v35
    %v78 = vpop.permute.xlu0 %77
    %81 = vset.pattern.permute.xlu0 0
    %82 = vperm.xlu0 %81, %v36
    %v83 = vpop.permute.xlu0 %82
    %86 = vset.pattern.permute.xlu0 0
    %87 = vperm.xlu0 %86, %v37
    %v88 = vpop.permute.xlu0 %87
    %91 = vset.pattern.permute.xlu0 0
    %92 = vperm.xlu0 %91, %v38
    %v93 = vpop.permute.xlu0 %92
    %96 = vset.pattern.permute.xlu0 0
    %97 = vperm.xlu0 %96, %v39
    %v98 = vpop.permute.xlu0 %97
    %101 = vset.pattern.permute.xlu0 0
    %102 = vperm.xlu0 %101, %v40
    %v103 = vpop.permute.xlu0 %102
    %106 = vset.pattern.permute.xlu0 0
    %107 = vperm.xlu0 %106, %v41
    %v108 = vpop.permute.xlu0 %107
    %111 = vset.pattern.permute.xlu0 0
    %112 = vperm.xlu0 %111, %v42
    %v113 = vpop.permute.xlu0 %112
    %116 = vset.pattern.permute.xlu0 0
    %117 = vperm.xlu0 %116, %v43
    %v118 = vpop.permute.xlu0 %117
    %121 = vset.pattern.permute.xlu0 0
    %122 = vperm.xlu0 %121, %v44
    %v123 = vpop.permute.xlu0 %122
    %v125 = vlaneseq
    %v126 = vshrl.u32 %v125, 7
    %v127 = vsub.s32 0, %v126
    %v128 = vrot.slane %v28, %v127
    %v129 = vmul.f32 %v48, %v128
    %v130 = vmul.f32 %v53, %v128
    %v131 = vmul.f32 %v58, %v128
    %v132 = vmul.f32 %v63, %v128
    %v133 = vmul.f32 %v68, %v128
    %v134 = vmul.f32 %v73, %v128
    %v135 = vmul.f32 %v78, %v128
    %v136 = vmul.f32 %v83, %v128
    %v137 = vmul.f32 %v88, %v128
    %v138 = vmul.f32 %v93, %v128
    %v139 = vmul.f32 %v98, %v128
    %v140 = vmul.f32 %v103, %v128
    %v141 = vmul.f32 %v108, %v128
    %v142 = vmul.f32 %v113, %v128
    %v143 = vmul.f32 %v118, %v128
    %v144 = vmul.f32 %v123, %v128
    %145 = vset.pattern.permute.xlu0 1
    %146 = vperm.xlu0 %145, %v29
    %v147 = vpop.permute.xlu0 %146
    %149 = vset.pattern.permute.xlu0 1
    %150 = vperm.xlu0 %149, %v30
    %v151 = vpop.permute.xlu0 %150
    %153 = vset.pattern.permute.xlu0 1
    %154 = vperm.xlu0 %153, %v31
    %v155 = vpop.permute.xlu0 %154
    %157 = vset.pattern.permute.xlu0 1
    %158 = vperm.xlu0 %157, %v32
    %v159 = vpop.permute.xlu0 %158
    %161 = vset.pattern.permute.xlu0 1
    %162 = vperm.xlu0 %161, %v33
    %v163 = vpop.permute.xlu0 %162
    %165 = vset.pattern.permute.xlu0 1
    %166 = vperm.xlu0 %165, %v34
    %v167 = vpop.permute.xlu0 %166
    %169 = vset.pattern.permute.xlu0 1
    %170 = vperm.xlu0 %169, %v35
    %v171 = vpop.permute.xlu0 %170
    %173 = vset.pattern.permute.xlu0 1
    %174 = vperm.xlu0 %173, %v36
    %v175 = vpop.permute.xlu0 %174
    %177 = vset.pattern.permute.xlu0 1
    %178 = vperm.xlu0 %177, %v37
    %v179 = vpop.permute.xlu0 %178
    %181 = vset.pattern.permute.xlu0 1
    %182 = vperm.xlu0 %181, %v38
    %v183 = vpop.permute.xlu0 %182
    %185 = vset.pattern.permute.xlu0 1
    %186 = vperm.xlu0 %185, %v39
    %v187 = vpop.permute.xlu0 %186
    %189 = vset.pattern.permute.xlu0 1
    %190 = vperm.xlu0 %189, %v40
    %v191 = vpop.permute.xlu0 %190
    %193 = vset.pattern.permute.xlu0 1
    %194 = vperm.xlu0 %193, %v41
    %v195 = vpop.permute.xlu0 %194
    %197 = vset.pattern.permute.xlu0 1
    %198 = vperm.xlu0 %197, %v42
    %v199 = vpop.permute.xlu0 %198
    %201 = vset.pattern.permute.xlu0 1
    %202 = vperm.xlu0 %201, %v43
    %v203 = vpop.permute.xlu0 %202
    %205 = vset.pattern.permute.xlu0 1
    %206 = vperm.xlu0 %205, %v44
    %v207 = vpop.permute.xlu0 %206
    %v209 = vlaneseq
    %v210 = vshrl.u32 %v209, 7
    %v211 = vsub.s32 1, %v210
    %v212 = vrot.slane %v28, %v211
    %v213 = vmul.f32 %v147, %v212
    %v214 = vmul.f32 %v151, %v212
    %v215 = vmul.f32 %v155, %v212
    %v216 = vmul.f32 %v159, %v212
    %v217 = vmul.f32 %v163, %v212
    %v218 = vmul.f32 %v167, %v212
    %v219 = vmul.f32 %v171, %v212
    %v220 = vmul.f32 %v175, %v212
    %v221 = vmul.f32 %v179, %v212
    %v222 = vmul.f32 %v183, %v212
    %v223 = vmul.f32 %v187, %v212
    %v224 = vmul.f32 %v191, %v212
    %v225 = vmul.f32 %v195, %v212
    %v226 = vmul.f32 %v199, %v212
    %v227 = vmul.f32 %v203, %v212
    %v228 = vmul.f32 %v207, %v212
    %v229 = vadd.f32 %v129, %v213
    %v230 = vadd.f32 %v130, %v214
    %v231 = vadd.f32 %v131, %v215
    %v232 = vadd.f32 %v132, %v216
    %v233 = vadd.f32 %v133, %v217
    %v234 = vadd.f32 %v134, %v218
    %v235 = vadd.f32 %v135, %v219
    %v236 = vadd.f32 %v136, %v220
    %v237 = vadd.f32 %v137, %v221
    %v238 = vadd.f32 %v138, %v222
    %v239 = vadd.f32 %v139, %v223
    %v240 = vadd.f32 %v140, %v224
    %v241 = vadd.f32 %v141, %v225
    %v242 = vadd.f32 %v142, %v226
    %v243 = vadd.f32 %v143, %v227
    %v244 = vadd.f32 %v144, %v228
    %v245 = vld [vmem:[%s2] sm:$0xff]
    %v246 = vld [vmem:[%s2 + $0x8] sm:$0xff]
    %v247 = vld [vmem:[%s2 + $0x10] sm:$0xff]
    %v248 = vld [vmem:[%s2 + $0x18] sm:$0xff]
    %v249 = vld [vmem:[%s2 + $0x20] sm:$0xff]
    %v250 = vld [vmem:[%s2 + $0x28] sm:$0xff]
    %v251 = vld [vmem:[%s2 + $0x30] sm:$0xff]
    %v252 = vld [vmem:[%s2 + $0x38] sm:$0xff]
    %v253 = vld [vmem:[%s2 + $0x40] sm:$0xff]
    %v254 = vld [vmem:[%s2 + $0x48] sm:$0xff]
    %v255 = vld [vmem:[%s2 + $0x50] sm:$0xff]
    %v256 = vld [vmem:[%s2 + $0x58] sm:$0xff]
    %v257 = vld [vmem:[%s2 + $0x60] sm:$0xff]
    %v258 = vld [vmem:[%s2 + $0x68] sm:$0xff]
    %v259 = vld [vmem:[%s2 + $0x70] sm:$0xff]
    %v260 = vld [vmem:[%s2 + $0x78] sm:$0xff]
    %262 = vset.pattern.permute.xlu0 0
    %263 = vperm.xlu0 %262, %v245
    %v264 = vpop.permute.xlu0 %263
    %267 = vset.pattern.permute.xlu0 0
    %268 = vperm.xlu0 %267, %v246
    %v269 = vpop.permute.xlu0 %268
    %272 = vset.pattern.permute.xlu0 0
    %273 = vperm.xlu0 %272, %v247
    %v274 = vpop.permute.xlu0 %273
    %277 = vset.pattern.permute.xlu0 0
    %278 = vperm.xlu0 %277, %v248
    %v279 = vpop.permute.xlu0 %278
    %282 = vset.pattern.permute.xlu0 0
    %283 = vperm.xlu0 %282, %v249
    %v284 = vpop.permute.xlu0 %283
    %287 = vset.pattern.permute.xlu0 0
    %288 = vperm.xlu0 %287, %v250
    %v289 = vpop.permute.xlu0 %288
    %292 = vset.pattern.permute.xlu0 0
    %293 = vperm.xlu0 %292, %v251
    %v294 = vpop.permute.xlu0 %293
    %297 = vset.pattern.permute.xlu0 0
    %298 = vperm.xlu0 %297, %v252
    %v299 = vpop.permute.xlu0 %298
    %302 = vset.pattern.permute.xlu0 0
    %303 = vperm.xlu0 %302, %v253
    %v304 = vpop.permute.xlu0 %303
    %307 = vset.pattern.permute.xlu0 0
    %308 = vperm.xlu0 %307, %v254
    %v309 = vpop.permute.xlu0 %308
    %312 = vset.pattern.permute.xlu0 0
    %313 = vperm.xlu0 %312, %v255
    %v314 = vpop.permute.xlu0 %313
    %317 = vset.pattern.permute.xlu0 0
    %318 = vperm.xlu0 %317, %v256
    %v319 = vpop.permute.xlu0 %318
    %322 = vset.pattern.permute.xlu0 0
    %323 = vperm.xlu0 %322, %v257
    %v324 = vpop.permute.xlu0 %323
    %327 = vset.pattern.permute.xlu0 0
    %328 = vperm.xlu0 %327, %v258
    %v329 = vpop.permute.xlu0 %328
    %332 = vset.pattern.permute.xlu0 0
    %333 = vperm.xlu0 %332, %v259
    %v334 = vpop.permute.xlu0 %333
    %337 = vset.pattern.permute.xlu0 0
    %338 = vperm.xlu0 %337, %v260
    %v339 = vpop.permute.xlu0 %338
    %v341 = vadd.f32 %v229, %v264
    %v342 = vadd.f32 %v230, %v269
    %v343 = vadd.f32 %v231, %v274
    %v344 = vadd.f32 %v232, %v279
    %v345 = vadd.f32 %v233, %v284
    %v346 = vadd.f32 %v234, %v289
    %v347 = vadd.f32 %v235, %v294
    %v348 = vadd.f32 %v236, %v299
    %v349 = vadd.f32 %v237, %v304
    %v350 = vadd.f32 %v238, %v309
    %v351 = vadd.f32 %v239, %v314
    %v352 = vadd.f32 %v240, %v319
    %v353 = vadd.f32 %v241, %v324
    %v354 = vadd.f32 %v242, %v329
    %v355 = vadd.f32 %v243, %v334
    %v356 = vadd.f32 %v244, %v339
    %v357 = vtanh.pop %v341
    %v358 = vtanh.pop %v342
    %v359 = vtanh.pop %v343
    %v360 = vtanh.pop %v344
    %v361 = vtanh.pop %v345
    %v362 = vtanh.pop %v346
    %v363 = vtanh.pop %v347
    %v364 = vtanh.pop %v348
    %v365 = vtanh.pop %v349
    %v366 = vtanh.pop %v350
    %v367 = vtanh.pop %v351
    %v368 = vtanh.pop %v352
    %v369 = vtanh.pop %v353
    %v370 = vtanh.pop %v354
    %v371 = vtanh.pop %v355
    %v372 = vtanh.pop %v356
    %v373 = vld [vmem:[%s3] sm:$0xf]
    %v374 = vld [vmem:[%s3 + $0x4] sm:$0xf]
    %v375 = vld [vmem:[%s3 + $0x8] sm:$0xf]
    %v376 = vld [vmem:[%s3 + $0xc] sm:$0xf]
    %v377 = vld [vmem:[%s3 + $0x10] sm:$0xf]
    %v378 = vld [vmem:[%s3 + $0x14] sm:$0xf]
    %v379 = vld [vmem:[%s3 + $0x18] sm:$0xf]
    %v380 = vld [vmem:[%s3 + $0x1c] sm:$0xf]
    %v381 = vld [vmem:[%s3 + $0x20] sm:$0xf]
    %v382 = vld [vmem:[%s3 + $0x24] sm:$0xf]
    %v383 = vld [vmem:[%s3 + $0x28] sm:$0xf]
    %v384 = vld [vmem:[%s3 + $0x2c] sm:$0xf]
    %v385 = vld [vmem:[%s3 + $0x30] sm:$0xf]
    %v386 = vld [vmem:[%s3 + $0x34] sm:$0xf]
    %v387 = vld [vmem:[%s3 + $0x38] sm:$0xf]
    %v388 = vld [vmem:[%s3 + $0x3c] sm:$0xf]
    %v389 = vpack.c.bf16 %v358, %v357
    %v390 = vpack.c.bf16 %v360, %v359
    %v391 = vpack.c.bf16 %v362, %v361
    %v392 = vpack.c.bf16 %v364, %v363
    %v393 = vpack.c.bf16 %v366, %v365
    %v394 = vpack.c.bf16 %v368, %v367
    %v395 = vpack.c.bf16 %v370, %v369
    %v396 = vpack.c.bf16 %v372, %v371
    %v397 = vld [vmem:[%s4] sm:$0xff]
    %v398 = vld [vmem:[%s4 + $0x8] sm:$0xff]
    %v399 = vld [vmem:[%s4 + $0x10] sm:$0xff]
    %v400 = vld [vmem:[%s4 + $0x18] sm:$0xff]
    %v401 = vld [vmem:[%s4 + $0x20] sm:$0xff]
    %v402 = vld [vmem:[%s4 + $0x28] sm:$0xff]
    %v403 = vld [vmem:[%s4 + $0x30] sm:$0xff]
    %v404 = vld [vmem:[%s4 + $0x38] sm:$0xff]
    %v405 = vld [vmem:[%s4 + $0x40] sm:$0xff]
    %v406 = vld [vmem:[%s4 + $0x48] sm:$0xff]
    %v407 = vld [vmem:[%s4 + $0x50] sm:$0xff]
    %v408 = vld [vmem:[%s4 + $0x58] sm:$0xff]
    %v409 = vld [vmem:[%s4 + $0x60] sm:$0xff]
    %v410 = vld [vmem:[%s4 + $0x68] sm:$0xff]
    %v411 = vld [vmem:[%s4 + $0x70] sm:$0xff]
    %v412 = vld [vmem:[%s4 + $0x78] sm:$0xff]
    %414 = vset.pattern.permute.xlu0 0
    %415 = vperm.xlu0 %414, %v397
    %v416 = vpop.permute.xlu0 %415
    %419 = vset.pattern.permute.xlu0 0
    %420 = vperm.xlu0 %419, %v398
    %v421 = vpop.permute.xlu0 %420
    %424 = vset.pattern.permute.xlu0 0
    %425 = vperm.xlu0 %424, %v399
    %v426 = vpop.permute.xlu0 %425
    %429 = vset.pattern.permute.xlu0 0
    %430 = vperm.xlu0 %429, %v400
    %v431 = vpop.permute.xlu0 %430
    %434 = vset.pattern.permute.xlu0 0
    %435 = vperm.xlu0 %434, %v401
    %v436 = vpop.permute.xlu0 %435
    %439 = vset.pattern.permute.xlu0 0
    %440 = vperm.xlu0 %439, %v402
    %v441 = vpop.permute.xlu0 %440
    %444 = vset.pattern.permute.xlu0 0
    %445 = vperm.xlu0 %444, %v403
    %v446 = vpop.permute.xlu0 %445
    %449 = vset.pattern.permute.xlu0 0
    %450 = vperm.xlu0 %449, %v404
    %v451 = vpop.permute.xlu0 %450
    %454 = vset.pattern.permute.xlu0 0
    %455 = vperm.xlu0 %454, %v405
    %v456 = vpop.permute.xlu0 %455
    %459 = vset.pattern.permute.xlu0 0
    %460 = vperm.xlu0 %459, %v406
    %v461 = vpop.permute.xlu0 %460
    %464 = vset.pattern.permute.xlu0 0
    %465 = vperm.xlu0 %464, %v407
    %v466 = vpop.permute.xlu0 %465
    %469 = vset.pattern.permute.xlu0 0
    %470 = vperm.xlu0 %469, %v408
    %v471 = vpop.permute.xlu0 %470
    %474 = vset.pattern.permute.xlu0 0
    %475 = vperm.xlu0 %474, %v409
    %v476 = vpop.permute.xlu0 %475
    %479 = vset.pattern.permute.xlu0 0
    %480 = vperm.xlu0 %479, %v410
    %v481 = vpop.permute.xlu0 %480
    %484 = vset.pattern.permute.xlu0 0
    %485 = vperm.xlu0 %484, %v411
    %v486 = vpop.permute.xlu0 %485
    %489 = vset.pattern.permute.xlu0 0
    %490 = vperm.xlu0 %489, %v412
    %v491 = vpop.permute.xlu0 %490
    %v509 = vunpack.c.l.b16 %v373
    %v510 = vunpack.c.l.b16 %v374
    %v511 = vunpack.c.l.b16 %v375
    %v512 = vunpack.c.l.b16 %v376
    %v513 = vunpack.c.l.b16 %v377
    %v514 = vunpack.c.l.b16 %v378
    %v515 = vunpack.c.l.b16 %v379
    %v516 = vunpack.c.l.b16 %v380
    %v517 = vunpack.c.l.b16 %v381
    %v518 = vunpack.c.l.b16 %v382
    %v519 = vunpack.c.l.b16 %v383
    %v520 = vunpack.c.l.b16 %v384
    %v521 = vunpack.c.l.b16 %v385
    %v522 = vunpack.c.l.b16 %v386
    %v523 = vunpack.c.l.b16 %v387
    %v524 = vunpack.c.l.b16 %v388
    %v525 = vpack.c.b16 %v510, %v509
    %v526 = vpack.c.b16 %v512, %v511
    %v527 = vpack.c.b16 %v514, %v513
    %v528 = vpack.c.b16 %v516, %v515
    %v529 = vpack.c.b16 %v518, %v517
    %v530 = vpack.c.b16 %v520, %v519
    %v531 = vpack.c.b16 %v522, %v521
    %v532 = vpack.c.b16 %v524, %v523
    %541 = vmatprep.subr.bf16.mxu0 0
    %542 = vmatpush1.bf16.msra.mxu0 %v396
    %543 = vmatprep.subr.bf16.mxu0 0
    %544 = vmatpush1.bf16.msra.mxu0 %v395
    %545 = vmatprep.subr.bf16.mxu0 0
    %546 = vmatpush1.bf16.msra.mxu0 %v394
    %547 = vmatprep.subr.bf16.mxu0 0
    %548 = vmatpush1.bf16.msra.mxu0 %v393
    %549 = vmatprep.subr.bf16.mxu0 0
    %550 = vmatpush1.bf16.msra.mxu0 %v392
    %551 = vmatprep.subr.bf16.mxu0 0
    %552 = vmatpush1.bf16.msra.mxu0 %v391
    %553 = vmatprep.subr.bf16.mxu0 0
    %554 = vmatpush1.bf16.msra.mxu0 %v390
    %555 = vmatprep.subr.bf16.mxu0 0
    %556 = vmatpush1.bf16.msra.mxu0 %v389
    %557 = vmatprep.subr.bf16.mxu0 0
    %558 = vmatpush2.bf16.msra.mxu0 0
    %559 = vmatprep.subr.bf16.mxu0 0
    %560 = vmatpush2.bf16.msra.mxu0 0
    %561 = vmatprep.subr.bf16.mxu0 0
    %562 = vmatpush2.bf16.msra.mxu0 0
    %563 = vmatprep.subr.bf16.mxu0 0
    %564 = vmatpush2.bf16.msra.mxu0 0
    %565 = vmatprep.subr.bf16.mxu0 0
    %566 = vmatpush2.bf16.msra.mxu0 0
    %567 = vmatprep.subr.bf16.mxu0 0
    %568 = vmatpush2.bf16.msra.mxu0 0
    %569 = vmatprep.subr.bf16.mxu0 0
    %570 = vmatpush2.bf16.msra.mxu0 0
    %571 = vmatprep.subr.bf16.mxu0 0
    %572 = vmatpush2.bf16.msra.mxu0 0
    %573 = vmatprep.mubr.bf16.mxu0 0
    %574 = vmatmul.mubr.bf16.gmra.mxu0 %v525
    %v575 = vpop.f32.mrf.mxu0
    %v576 = vadd.f32 %v416, %v575
    %v577 = vpop.f32.mrf.mxu0
    %v578 = vpop.f32.mrf.mxu0
    %v579 = vadd.f32 %v421, %v578
    %v580 = vpop.f32.mrf.mxu0
    %581 = vmatprep.mubr.bf16.mxu0 0
    %582 = vmatmul.mubr.bf16.gmra.mxu0 %v526
    %v583 = vpop.f32.mrf.mxu0
    %v584 = vadd.f32 %v426, %v583
    %v585 = vpop.f32.mrf.mxu0
    %v586 = vpop.f32.mrf.mxu0
    %v587 = vadd.f32 %v431, %v586
    %v588 = vpop.f32.mrf.mxu0
    %589 = vmatprep.mubr.bf16.mxu0 0
    %590 = vmatmul.mubr.bf16.gmra.mxu0 %v527
    %v591 = vpop.f32.mrf.mxu0
    %v592 = vadd.f32 %v436, %v591
    %v593 = vpop.f32.mrf.mxu0
    %v594 = vpop.f32.mrf.mxu0
    %v595 = vadd.f32 %v441, %v594
    %v596 = vpop.f32.mrf.mxu0
    %597 = vmatprep.mubr.bf16.mxu0 0
    %598 = vmatmul.mubr.bf16.gmra.mxu0 %v528
    %v599 = vpop.f32.mrf.mxu0
    %v600 = vadd.f32 %v446, %v599
    %v601 = vpop.f32.mrf.mxu0
    %v602 = vpop.f32.mrf.mxu0
    %v603 = vadd.f32 %v451, %v602
    %v604 = vpop.f32.mrf.mxu0
    %605 = vmatprep.mubr.bf16.mxu0 0
    %606 = vmatmul.mubr.bf16.gmra.mxu0 %v529
    %v607 = vpop.f32.mrf.mxu0
    %v608 = vadd.f32 %v456, %v607
    %v609 = vpop.f32.mrf.mxu0
    %v610 = vpop.f32.mrf.mxu0
    %v611 = vadd.f32 %v461, %v610
    %v612 = vpop.f32.mrf.mxu0
    %613 = vmatprep.mubr.bf16.mxu0 0
    %614 = vmatmul.mubr.bf16.gmra.mxu0 %v530
    %v615 = vpop.f32.mrf.mxu0
    %v616 = vadd.f32 %v466, %v615
    %v617 = vpop.f32.mrf.mxu0
    %v618 = vpop.f32.mrf.mxu0
    %v619 = vadd.f32 %v471, %v618
    %v620 = vpop.f32.mrf.mxu0
    %621 = vmatprep.mubr.bf16.mxu0 0
    %622 = vmatmul.mubr.bf16.gmra.mxu0 %v531
    %v623 = vpop.f32.mrf.mxu0
    %v624 = vadd.f32 %v476, %v623
    %v625 = vpop.f32.mrf.mxu0
    %v626 = vpop.f32.mrf.mxu0
    %v627 = vadd.f32 %v481, %v626
    %v628 = vpop.f32.mrf.mxu0
    %629 = vmatprep.mubr.bf16.mxu0 0
    %630 = vmatmul.mubr.bf16.gmra.mxu0 %v532
    %v631 = vpop.f32.mrf.mxu0
    %v632 = vadd.f32 %v486, %v631
    %v633 = vpop.f32.mrf.mxu0
    %v634 = vpop.f32.mrf.mxu0
    %v635 = vadd.f32 %v491, %v634
    %v636 = vpop.f32.mrf.mxu0
    %637 = vdwg.mxu0
    %v638 = vtanh.pop %v576
    %v639 = vtanh.pop %v579
    %v640 = vtanh.pop %v584
    %v641 = vtanh.pop %v587
    %v642 = vtanh.pop %v592
    %v643 = vtanh.pop %v595
    %v644 = vtanh.pop %v600
    %v645 = vtanh.pop %v603
    %v646 = vtanh.pop %v608
    %v647 = vtanh.pop %v611
    %v648 = vtanh.pop %v616
    %v649 = vtanh.pop %v619
    %v650 = vtanh.pop %v624
    %v651 = vtanh.pop %v627
    %v652 = vtanh.pop %v632
    %v653 = vtanh.pop %v635
    %v654 = vld [vmem:[%s5] sm:$0x3]
    %v655 = vld [vmem:[%s6] sm:$0x3]
    %657 = vset.pattern.permute.xlu0 0
    %658 = vperm.xlu0 %657, %v655
    %v659 = vpop.permute.xlu0 %658
    %661 = vmatprep.subr.mxu0 0.0
    %662 = vmatpush1.msra.mxu0 %v653
    %663 = vmatprep.subr.mxu0 0.0
    %664 = vmatpush1.msra.mxu0 %v652
    %665 = vmatprep.subr.mxu0 0.0
    %666 = vmatpush1.msra.mxu0 %v651
    %667 = vmatprep.subr.mxu0 0.0
    %668 = vmatpush1.msra.mxu0 %v650
    %669 = vmatprep.subr.mxu0 0.0
    %670 = vmatpush1.msra.mxu0 %v649
    %671 = vmatprep.subr.mxu0 0.0
    %672 = vmatpush1.msra.mxu0 %v648
    %673 = vmatprep.subr.mxu0 0.0
    %674 = vmatpush1.msra.mxu0 %v647
    %675 = vmatprep.subr.mxu0 0.0
    %676 = vmatpush1.msra.mxu0 %v646
    %677 = vmatprep.subr.mxu0 0.0
    %678 = vmatpush1.msra.mxu0 %v645
    %679 = vmatprep.subr.mxu0 0.0
    %680 = vmatpush1.msra.mxu0 %v644
    %681 = vmatprep.subr.mxu0 0.0
    %682 = vmatpush1.msra.mxu0 %v643
    %683 = vmatprep.subr.mxu0 0.0
    %684 = vmatpush1.msra.mxu0 %v642
    %685 = vmatprep.subr.mxu0 0.0
    %686 = vmatpush1.msra.mxu0 %v641
    %687 = vmatprep.subr.mxu0 0.0
    %688 = vmatpush1.msra.mxu0 %v640
    %689 = vmatprep.subr.mxu0 0.0
    %690 = vmatpush1.msra.mxu0 %v639
    %691 = vmatprep.subr.mxu0 0.0
    %692 = vmatpush1.msra.mxu0 %v638
    %693 = vmatprep.subr.mxu0 0.0
    %694 = vmatpush2.msra.mxu0 0.0
    %695 = vmatprep.subr.mxu0 0.0
    %696 = vmatpush2.msra.mxu0 0.0
    %697 = vmatprep.subr.mxu0 0.0
    %698 = vmatpush2.msra.mxu0 0.0
    %699 = vmatprep.subr.mxu0 0.0
    %700 = vmatpush2.msra.mxu0 0.0
    %701 = vmatprep.subr.mxu0 0.0
    %702 = vmatpush2.msra.mxu0 0.0
    %703 = vmatprep.subr.mxu0 0.0
    %704 = vmatpush2.msra.mxu0 0.0
    %705 = vmatprep.subr.mxu0 0.0
    %706 = vmatpush2.msra.mxu0 0.0
    %707 = vmatprep.subr.mxu0 0.0
    %708 = vmatpush2.msra.mxu0 0.0
    %709 = vmatprep.subr.mxu0 0.0
    %710 = vmatpush2.msra.mxu0 0.0
    %711 = vmatprep.subr.mxu0 0.0
    %712 = vmatpush2.msra.mxu0 0.0
    %713 = vmatprep.subr.mxu0 0.0
    %714 = vmatpush2.msra.mxu0 0.0
    %715 = vmatprep.subr.mxu0 0.0
    %716 = vmatpush2.msra.mxu0 0.0
    %717 = vmatprep.subr.mxu0 0.0
    %718 = vmatpush2.msra.mxu0 0.0
    %719 = vmatprep.subr.mxu0 0.0
    %720 = vmatpush2.msra.mxu0 0.0
    %721 = vmatprep.subr.mxu0 0.0
    %722 = vmatpush2.msra.mxu0 0.0
    %723 = vmatprep.subr.mxu0 0.0
    %724 = vmatpush2.msra.mxu0 0.0
    %725 = vmatprep.mubr.f32.mxu0 0.0
    %726 = vmatmul.mubr.f32.gmra.mxu0 %v654
    %v727 = vpop.f32.mrf.mxu0
    %v728 = vadd.f32 %v659, %v727
    %v729 = vpop.f32.mrf.mxu0
    %730 = vdwg.mxu0
    %v731 = vtanh.pop %v728
    %732 = vst [vmem:[#allocation2] sm:$0x3] %v731
    // Predicated region
    $region30: #{tpu_custom_call.1} parent=1 // pred_check
      _
    $region31: #{tpu_custom_call.1} parent=1 // pred_check_branch
      %734 = sbr.rel (0) target = $region33
    $region32: #{tpu_custom_call.1} parent=1 // pred_region
      %s736 = ssub.s32 32, 32
      %737 = vsyncadd [#allocation3], %s736
      %s739 = sshll.u32 [#allocation2], 4
      %s740 = int_to_ptr.vmem [resolvable:$true] %s739
      %742 = dma.vmem_to_hbm [thread:$0]  %s740, 32, %s7, [#allocation3]
    $region33: #{tpu_custom_call.1} parent=1 // pred_fallthru
      _
    // Predicated region
    $region34: #{tpu_custom_call.1} parent=1 // pred_check
      _
    $region35: #{tpu_custom_call.1} parent=1 // pred_check_branch
      %744 = sbr.rel (0) target = $region37
    $region36: #{tpu_custom_call.1} parent=1 // pred_region
      %745 = dma.done [#allocation3], 32
    $region37: #{tpu_custom_call.1} parent=1 // pred_fallthru
      _
    %746 = vsyncpa [#allocation3], 1

</llo_original>
